<compile_context>
chip_gen: v7x
topology: tpu7x:2x2x1
jax: 0.10.0
libtpu: 0.0.40
codegen_flags: <defaults>
</compile_context>

<pallas_src>
import functools

import jax
import jax.numpy as jnp
from jax.experimental import pallas as pl
from jax.experimental.pallas import tpu as pltpu

_LANES = 128
_BATCH_PER_ROW = _LANES // 4   # 32 batch rows per 128-lane slab row
_NUM_CORE_SPLITS = 2           # leading "parallel" axis (v7x: one per TC)


def _euclidean_loss_kernel(out_ref, tgt_ref, sum_ref, *,
                           n_rows, n_tiles, tiles_per_core, num_splits):
    # out_ref/tgt_ref: (tr, 128) tiles of the flattened coords x1,y1,x2,y2,...
    # sum_ref: this core's resident (8, 128) f32 partial-sum block.
    c = pl.program_id(0)           # core-split index ("parallel")
    i = pl.program_id(1)           # tile index within the split ("arbitrary")
    tile_idx = c * tiles_per_core + i
    tr = out_ref.shape[0]

    @pl.when(i == 0)
    def _init():
        sum_ref[...] = jnp.zeros_like(sum_ref)

    def _accumulate():
        # In-kernel upcast: inputs stay in their native dtype in HBM/VMEM.
        o = out_ref[...].astype(jnp.float32)
        t = tgt_ref[...].astype(jnp.float32)
        diff = o - t
        sq = diff * diff                         # x1^2,y1^2,x2^2,y2^2,...

        if n_rows % tr != 0:
            # Ragged last tile: rows past the real data hold undefined VMEM.
            # Zero them with a select (NOT a multiply: NaN*0 would propagate).
            row = jax.lax.broadcasted_iota(jnp.int32, (tr, 1), 0) + tile_idx * tr
            sq = jnp.where(row < n_rows, sq, 0.0)

        # Bring each y^2 onto its partner x^2 lane: shifted[:, j] = sq[:, j+1]
        # (roll by 127 == roll by -1).  One XLU rotate per vreg.  Odd lanes of
        # pairsum hold cross-pair garbage and are zeroed before the sqrt
        # (sqrt(0) = 0, so zero-padded batch rows also contribute nothing).
        shifted = pltpu.roll(sq, shift=_LANES - 1, axis=1)
        pairsum = sq + shifted
        lane = jax.lax.broadcasted_iota(jnp.int32, (1, _LANES), 1)
        pairsum = jnp.where((lane & 1) == 0, pairsum, 0.0)
        d = jnp.sqrt(pairsum)                    # per-point distances (even lanes)

        if tr % 8 == 0:
            # Fold the tile into the (8,128) accumulator with vreg-wise adds.
            sum_ref[...] += d.reshape(tr // 8, 8, _LANES).sum(axis=0)
        else:
            # Tiny full-array tile (tr == n_rows < 8).
            sum_ref[0:tr, :] += d

    if num_splits * tiles_per_core > n_tiles:
        # A phantom tile exists (odd tile count): skip it.  Its input
        # index_map is clamped to the last valid block, so DMAs stay in range.
        pl.when(tile_idx < n_tiles)(_accumulate)
    else:
        _accumulate()


def _pick_tile_rows(n_rows, block_rows, target_tiles=8):
    """Block rows: multiple of 8 (or the full extent), >= ~target_tiles tiles."""
    if n_rows <= 8:
        return n_rows
    tr = min(block_rows, pl.cdiv(n_rows, target_tiles))
    tr = max(8, ((tr + 7) // 8) * 8)
    return n_rows if tr >= n_rows else tr


def _pair_distance_sum(output, target):
    """Pure-JAX sum of per-row (d1 + d2); used for the unaligned tail."""
    output = output.astype(jnp.float32)
    target = target.astype(jnp.float32)
    d1 = jnp.sqrt(jnp.sum((output[:, :2] - target[:, :2]) ** 2, axis=1))
    d2 = jnp.sqrt(jnp.sum((output[:, 2:] - target[:, 2:]) ** 2, axis=1))
    return jnp.sum(d1 + d2)


def _euclidean_loss_pallas(output, target, *, block_rows=4096):
    """Pallas path.  output/target: (B, 4), any float dtype."""
    assert output.shape == target.shape
    assert output.ndim == 2 and output.shape[1] == 4
    B = output.shape[0]

    # Aligned prefix streams through the kernel (free row-major reshape to
    # (R, 128) slabs); the <=31-row tail is summed in plain JAX.  Only truly
    # tiny batches (< 32 rows) pay a (tiny) pad copy.
    b_main = (B // _BATCH_PER_ROW) * _BATCH_PER_ROW
    tail_sum = jnp.float32(0.0)
    if b_main == 0:
        pad = _BATCH_PER_ROW - B
        out_m = jnp.pad(output, ((0, pad), (0, 0)))
        tgt_m = jnp.pad(target, ((0, pad), (0, 0)))
    elif b_main < B:
        out_m, tgt_m = output[:b_main], target[:b_main]
        tail_sum = _pair_distance_sum(output[b_main:], target[b_main:])
    else:
        out_m, tgt_m = output, target

    out_f = out_m.reshape(-1, _LANES)
    tgt_f = tgt_m.reshape(-1, _LANES)
    n_rows = out_f.shape[0]

    tr = _pick_tile_rows(n_rows, block_rows)
    n_tiles = pl.cdiv(n_rows, tr)
    num_splits = min(_NUM_CORE_SPLITS, n_tiles)
    tiles_per_core = pl.cdiv(n_tiles, num_splits)

    def in_map(c, i):
        t = c * tiles_per_core + i
        return (jnp.minimum(t, n_tiles - 1), 0)   # clamp phantom tiles in-bounds

    kernel = functools.partial(
        _euclidean_loss_kernel, n_rows=n_rows, n_tiles=n_tiles,
        tiles_per_core=tiles_per_core, num_splits=num_splits)

    partials = pl.pallas_call(
        kernel,
        out_shape=jax.ShapeDtypeStruct((num_splits, 8, _LANES), jnp.float32),
        grid_spec=pltpu.PrefetchScalarGridSpec(
            num_scalar_prefetch=0,
            grid=(num_splits, tiles_per_core),
            in_specs=[
                pl.BlockSpec((tr, _LANES), in_map),
                pl.BlockSpec((tr, _LANES), in_map),
            ],
            out_specs=pl.BlockSpec((None, 8, _LANES), lambda c, i: (c, 0, 0)),
        ),
        compiler_params=pltpu.CompilerParams(
            dimension_semantics=("parallel", "arbitrary"),
            vmem_limit_bytes=32 * 1024 * 1024,
        ),
    )(out_f, tgt_f)

    total = jnp.sum(partials) + tail_sum
    return total * jnp.float32(1.0 / B)           # mean over the true B


def _euclidean_loss_reference(output, target):
    output = output.astype(jnp.float32)
    target = target.astype(jnp.float32)
    d1 = jnp.sqrt(jnp.sum((output[:, :2] - target[:, :2]) ** 2, axis=1))
    d2 = jnp.sqrt(jnp.sum((output[:, 2:] - target[:, 2:]) ** 2, axis=1))
    return jnp.mean(d1 + d2)


def euclidean_loss(output, target, *, block_rows=4096, min_pallas_batch=1024):
    """EuclideanLoss.forward: tiny batches use the fused XLA reference."""
    if output.shape[0] < min_pallas_batch:
        return _euclidean_loss_reference(output, target)
    return _euclidean_loss_pallas(output, target, block_rows=block_rows)


if __name__ == "__main__":
    key = jax.random.PRNGKey(0)
    k1, k2, k3, k4 = jax.random.split(key, 4)

    # 1) Small batch implied by the module (two 2-D points per row); call the
    #    Pallas path directly so the kernel itself is exercised.
    B_small = 8
    out_s = jax.random.normal(k1, (B_small, 4), dtype=jnp.float32)
    tgt_s = jax.random.normal(k2, (B_small, 4), dtype=jnp.float32)
    got_s = _euclidean_loss_pallas(out_s, tgt_s)
    jax.block_until_ready(got_s)
    want_s = _euclidean_loss_reference(out_s, tgt_s)
    assert jnp.allclose(got_s, want_s, atol=1e-5, rtol=1e-5), (got_s, want_s)

    # 2) Larger unaligned batch: the aligned prefix (1088 rows) streams through
    #    the kernel (multi-tile, ragged last tile, odd tile count -> phantom
    #    tile, 2-way core split); the 12-row tail takes the plain-JAX path.
    B_big = 1100
    out_b = jax.random.normal(k3, (B_big, 4), dtype=jnp.float32)
    tgt_b = jax.random.normal(k4, (B_big, 4), dtype=jnp.float32)
    got_b = _euclidean_loss_pallas(out_b, tgt_b, block_rows=8)
    jax.block_until_ready(got_b)
    want_b = _euclidean_loss_reference(out_b, tgt_b)
    assert jnp.allclose(got_b, want_b, atol=1e-5, rtol=1e-4), (got_b, want_b)

    # 3) bf16 inputs: upcast happens inside the kernel (no wrapper f32 copy).
    got_h = _euclidean_loss_pallas(out_b.astype(jnp.bfloat16),
                                   tgt_b.astype(jnp.bfloat16), block_rows=8)
    jax.block_until_ready(got_h)
    want_h = _euclidean_loss_reference(out_b.astype(jnp.bfloat16),
                                       tgt_b.astype(jnp.bfloat16))
    assert jnp.allclose(got_h, want_h, atol=1e-4, rtol=1e-4), (got_h, want_h)

    # 4) Public wrapper (dispatches tiny batches to the fused XLA reference).
    got_d = euclidean_loss(out_s, tgt_s)
    assert jnp.allclose(got_d, want_s, atol=1e-5, rtol=1e-5), (got_d, want_s)

    print("KERNEL_OK")
</pallas_src>

<mosaic_0001>
module attributes {stable_mosaic.version = 11 : i64} {
  func.func @_euclidean_loss_kernel(%arg0: i32, %arg1: i32, %arg2: memref<1x128xf32, #tpu.memory_space<vmem>>, %arg3: memref<1x128xf32, #tpu.memory_space<vmem>>, %arg4: memref<1x8x128xf32, #tpu.memory_space<vmem>>) attributes {dimension_semantics = [#tpu.dimension_semantics<parallel>, #tpu.dimension_semantics<arbitrary>], iteration_bounds = array<i64: 1, 1>, scalar_prefetch = 0 : i64, scratch_operands = 0 : i64, tpu.core_type = #tpu.core_type<tc>, window_params = [{transform_indices = @transform_0, window_bounds = array<i64: 1, 128>}, {transform_indices = @transform_1, window_bounds = array<i64: 1, 128>}, {transform_indices = @transform_2, window_bounds = array<i64: 1, 8, 128>}]} {
    %c0_i32 = arith.constant 0 : i32
    %0 = arith.cmpi eq, %arg1, %c0_i32 : i32
    %1 = arith.extui %0 : i1 to i32
    %c0_i32_0 = arith.constant 0 : i32
    %2 = arith.cmpi ne, %1, %c0_i32_0 : i32
    scf.if %2 {
      %cst_11 = arith.constant 0.000000e+00 : f32
      %23 = vector.broadcast %cst_11 : f32 to vector<8x128xf32>
      %c0_12 = arith.constant 0 : index
      %c0_13 = arith.constant 0 : index
      %c0_14 = arith.constant 0 : index
      %24 = vector.load %arg4[%c0_12, %c0_13, %c0_14] : memref<1x8x128xf32, #tpu.memory_space<vmem>>, vector<1x8x128xf32>
      %25 = vector.shape_cast %24 : vector<1x8x128xf32> to vector<8x128xf32>
      %26 = vector.shape_cast %23 : vector<8x128xf32> to vector<1x8x128xf32>
      tpu.vector_store %arg4[%c0_12, %c0_13, %c0_14], %26 {strides = array<i32>} : memref<1x8x128xf32, #tpu.memory_space<vmem>>, vector<1x8x128xf32>,
    } else {
    }
    %c0 = arith.constant 0 : index
    %c0_1 = arith.constant 0 : index
    %3 = vector.load %arg2[%c0, %c0_1] : memref<1x128xf32, #tpu.memory_space<vmem>>, vector<1x128xf32>
    %c0_2 = arith.constant 0 : index
    %c0_3 = arith.constant 0 : index
    %4 = vector.load %arg3[%c0_2, %c0_3] : memref<1x128xf32, #tpu.memory_space<vmem>>, vector<1x128xf32>
    %5 = arith.subf %3, %4 : vector<1x128xf32>
    %6 = arith.mulf %5, %5 : vector<1x128xf32>
    %c127_i32 = arith.constant 127 : i32
    %7 = tpu.dynamic_rotate %6 by %c127_i32 dim 1 : vector<1x128xf32>, i32 -> vector<1x128xf32>
    %8 = arith.addf %6, %7 : vector<1x128xf32>
    %9 = tpu.iota {dimensions = array<i32: 1>} : vector<1x128xi32>
    %c1_i32 = arith.constant 1 : i32
    %10 = vector.broadcast %c1_i32 : i32 to vector<1x128xi32>
    %11 = arith.andi %9, %10 : vector<1x128xi32>
    %c0_i32_4 = arith.constant 0 : i32
    %12 = vector.broadcast %c0_i32_4 : i32 to vector<1x128xi32>
    %13 = arith.cmpi eq, %11, %12 : vector<1x128xi32>
    %cst = arith.constant 0.000000e+00 : f32
    %14 = vector.broadcast %cst : f32 to vector<1x128xf32>
    %15 = arith.select %13, %8, %14 : vector<1x128xi1>, vector<1x128xf32>
    %16 = math.sqrt %15 : vector<1x128xf32>
    %c0_5 = arith.constant 0 : index
    %c0_6 = arith.constant 0 : index
    %c0_7 = arith.constant 0 : index
    %17 = vector.load %arg4[%c0_5, %c0_6, %c0_7] : memref<1x8x128xf32, #tpu.memory_space<vmem>>, vector<1x1x128xf32>
    %18 = vector.shape_cast %17 : vector<1x1x128xf32> to vector<1x128xf32>
    %19 = arith.addf %18, %16 : vector<1x128xf32>
    %c0_8 = arith.constant 0 : index
    %c0_9 = arith.constant 0 : index
    %c0_10 = arith.constant 0 : index
    %20 = vector.load %arg4[%c0_8, %c0_9, %c0_10] : memref<1x8x128xf32, #tpu.memory_space<vmem>>, vector<1x1x128xf32>
    %21 = vector.shape_cast %20 : vector<1x1x128xf32> to vector<1x128xf32>
    %22 = vector.shape_cast %19 : vector<1x128xf32> to vector<1x1x128xf32>
    tpu.vector_store %arg4[%c0_8, %c0_9, %c0_10], %22 {strides = array<i32>} : memref<1x8x128xf32, #tpu.memory_space<vmem>>, vector<1x1x128xf32>,
    return
  }
  func.func @transform_0(%arg0: i32, %arg1: i32) -> (i32, i32) {
    %c1_i32 = arith.constant 1 : i32
    %0 = arith.muli %arg0, %c1_i32 : i32
    %1 = arith.addi %0, %arg1 : i32
    %c0_i32 = arith.constant 0 : i32
    %2 = arith.minsi %1, %c0_i32 : i32
    %c0_i32_0 = arith.constant 0 : i32
    %c0_i32_1 = arith.constant 0 : i32
    return %2, %c0_i32_0 : i32, i32
  }
  func.func @transform_1(%arg0: i32, %arg1: i32) -> (i32, i32) {
    %c1_i32 = arith.constant 1 : i32
    %0 = arith.muli %arg0, %c1_i32 : i32
    %1 = arith.addi %0, %arg1 : i32
    %c0_i32 = arith.constant 0 : i32
    %2 = arith.minsi %1, %c0_i32 : i32
    %c0_i32_0 = arith.constant 0 : i32
    %c0_i32_1 = arith.constant 0 : i32
    return %2, %c0_i32_0 : i32, i32
  }
  func.func @transform_2(%arg0: i32, %arg1: i32) -> (i32, i32, i32) {
    %c0_i32 = arith.constant 0 : i32
    %c0_i32_0 = arith.constant 0 : i32
    %c0_i32_1 = arith.constant 0 : i32
    return %arg0, %c0_i32, %c0_i32_0 : i32, i32, i32
  }
}

</mosaic_0001>

<llo_original>
// kernel: tpu_custom_call.1
$region0: #{tpu_custom_call.1}
  #allocation0 [shape = 'u32[]', space=smem, size = 0x4, offset = 0x4, fixed_abs, tag = 'smem constant byte address 0x4 - core index']
  #allocation1 [shape = 'u32[144,128]{1,0:T(1,128)}', space=vmem, size = 0x12000, scoped, tag = 'internal scratch']
  %s0 = inlined_call_operand.hbm [shape: f32[1,128], index: 0, kind: input, shape index: {}]
  %s1 = inlined_call_operand.vmem [shape: f32[1,128], index: 1, kind: input, shape index: {}]
  %s2 = inlined_call_operand.hbm [shape: f32[1,8,128], index: 2, kind: output, shape index: {}]
  %s3 = sld [smem:[#allocation0]]
  $region26: #{tpu_custom_call.1} parent=0
    _
  %s5 = ssub.s32 1, %s3
  %s6 = scalar_select 0, %s5, %s3
  $region1: #{tpu_custom_call.1} parent=0
    #allocation2 [shape = 'u8[512]{0}', space=vmem, size = 0x400, scoped, tag = 'input window, operand 0, single buffered']
    #allocation3 [shape = 's32[1]{0}', space=sflag, size = 0x4, scoped, tag = 'scoped memory for tpu_custom_call.1']
    #allocation4 [shape = 's32[1]{0}', space=sflag, size = 0x4, scoped, tag = 'scoped memory for tpu_custom_call.1']
    #allocation5 [shape = 'u8[4096]{0}', space=vmem, size = 0x1000, scoped, tag = 'output window, operand 0, single buffered']
    %7 = vsyncpa [#allocation3], 0
    %8 = vsyncpa [#allocation4], 0
    // Predicated region
    $region2: #{tpu_custom_call.1} parent=1 // pred_check
      _
    $region3: #{tpu_custom_call.1} parent=1 // pred_check_branch
      %10 = sbr.rel (0) target = $region5
    $region4: #{tpu_custom_call.1} parent=1 // pred_region
      %s11 = sadd.s32 0, 0
      %p12 = scmp.lt.s32.totalorder %s11, 0
      %s13 = scalar_select %p12, %s11, 0
      %s15 = ssub.s32 16, 16
      %16 = vsyncadd [#allocation3], %s15
      %s17 = smul.addr %s13, 16
      %s18 = scalar_lea.hbm %s0, %s17
      %s20 = sshll.u32 [#allocation2], 4
      %s21 = int_to_ptr.vmem [resolvable:$true] %s20
      %23 = dma.hbm_to_vmem [thread:$0]  %s18, 16, %s21, [#allocation3]
    $region5: #{tpu_custom_call.1} parent=1 // pred_fallthru
      _
    // Predicated region
    $region6: #{tpu_custom_call.1} parent=1 // pred_check
      _
    $region7: #{tpu_custom_call.1} parent=1 // pred_check_branch
      %25 = sbr.rel (0) target = $region9
    $region8: #{tpu_custom_call.1} parent=1 // pred_region
      %s26 = sadd.s32 0, 0
      %p27 = scmp.lt.s32.totalorder %s26, 0
      %s28 = scalar_select %p27, %s26, 0
      %p29 = scmp.lt.s32.totalorder %s28, 0
      %s30 = scalar_select %p29, %s28, 0
      %s31 = scalar_lea.vmem %s1, %s30
      %s32 = sadd.s32 0, 0
      %p33 = scmp.lt.s32.totalorder %s32, 0
      %s34 = scalar_select %p33, %s32, 0
    $region9: #{tpu_custom_call.1} parent=1 // pred_fallthru
      _
    // Predicated region
    $region10: #{tpu_custom_call.1} parent=1 // pred_check
      _
    $region11: #{tpu_custom_call.1} parent=1 // pred_check_branch
      %36 = sbr.rel (0) target = $region13
    $region12: #{tpu_custom_call.1} parent=1 // pred_region
      %37 = dma.done [#allocation3], 16
    $region13: #{tpu_custom_call.1} parent=1 // pred_fallthru
      _
    %s38 = sadd.s32 0, 0
    %p39 = scmp.lt.s32.totalorder %s38, 0
    %s40 = scalar_select %p39, %s38, 0
    %p41 = scmp.lt.s32.totalorder %s40, 0
    %s42 = scalar_select %p41, %s40, 0
    %s43 = scalar_lea.vmem %s1, %s42
    %s44 = sadd.s32 0, 0
    %p45 = scmp.lt.s32.totalorder %s44, 0
    %s46 = scalar_select %p45, %s44, 0
    %s47 = sadd.s32 0, 0
    %p48 = scmp.lt.s32.totalorder %s47, 0
    %s49 = scalar_select %p48, %s47, 0
    %p50 = scmp.lt.s32.totalorder %s49, 0
    %s51 = scalar_select %p50, %s49, 0
    %s52 = scalar_lea.vmem %s1, %s51
    %s53 = sadd.s32 0, 0
    %p54 = scmp.lt.s32.totalorder %s53, 0
    %s55 = scalar_select %p54, %s53, 0
    %p56 = scmp.eq.s32.totalorder 0, 0
    // Predicated region
    $region14: #{tpu_custom_call.1} parent=1 // pred_check
      %p57 = pneg %p56
    $region15: #{tpu_custom_call.1} parent=1 // pred_check_branch
      %59 = sbr.rel (%p57) target = $region17
    $region16: #{tpu_custom_call.1} parent=1 // pred_region
      %60 = vst [vmem:[#allocation5] sm:$0xff] 0.0
    $region17: #{tpu_custom_call.1} parent=1 // pred_fallthru
      _
    %v61 = vld [vmem:[#allocation2] sm:$0x1]
    %v62 = vld [vmem:[%s52] sm:$0x1]
    %v63 = vsub.f32 %v61, %v62
    %v64 = vmul.f32 %v63, %v63
    %65 = vrot.lane.b32.xlu0 %v64, 127
    %v66 = vpop.permute.xlu0 %65
    %v67 = vadd.f32 %v64, %v66
    %v68 = vlaneseq
    %v69 = vand.u32 %v68, 127
    %v70 = vand.u32 %v69, 1
    %vm71 = vcmp.eq.s32.totalorder %v70, 0
    %v72 = vsel %vm71, %v67, 0.0
    %v73 = vrsqrt.pop %v72
    %v74 = vmul.f32 %v72, %v73
    %vm75 = vcmp.eq.f32.partialorder %v72, inf
    %v76 = vsel %vm75, %v72, %v74
    %vm77 = vcmp.eq.f32.partialorder %v72, 0.0
    %v78 = vand.u32 %v72, 2147483648
    %v79 = vsel %vm77, %v78, %v76
    %v80 = vld [vmem:[#allocation5] sm:$0x1]
    %v81 = vadd.f32 %v80, %v79
    %82 = vst [vmem:[#allocation5] sm:$0x1] %v81
    // Predicated region
    $region18: #{tpu_custom_call.1} parent=1 // pred_check
      _
    $region19: #{tpu_custom_call.1} parent=1 // pred_check_branch
      %84 = sbr.rel (0) target = $region21
    $region20: #{tpu_custom_call.1} parent=1 // pred_region
      %s86 = ssub.s32 128, 128
      %87 = vsyncadd [#allocation4], %s86
      %s89 = sshll.u32 [#allocation5], 4
      %s90 = int_to_ptr.vmem [resolvable:$true] %s89
      %92 = dma.vmem_to_hbm [thread:$0]  %s90, 128, %s2, [#allocation4]
    $region21: #{tpu_custom_call.1} parent=1 // pred_fallthru
      _
    // Predicated region
    $region22: #{tpu_custom_call.1} parent=1 // pred_check
      _
    $region23: #{tpu_custom_call.1} parent=1 // pred_check_branch
      %94 = sbr.rel (0) target = $region25
    $region24: #{tpu_custom_call.1} parent=1 // pred_region
      %95 = dma.done [#allocation4], 128
    $region25: #{tpu_custom_call.1} parent=1 // pred_fallthru
      _
    %96 = vsyncpa [#allocation3], 1
    %97 = vsyncpa [#allocation4], 1

</llo_original>
